<compile_context>
chip_gen: v5e
topology: v5e:2x2
jax: 0.10.0
libtpu: 0.0.40
codegen_flags: <defaults>
</compile_context>

<pallas_src>
import functools

import jax
import jax.numpy as jnp
from jax.experimental import pallas as pl
from jax.experimental.pallas import tpu as pltpu

IN_FEATURES = 28 * 28       # 784
HIDDEN = 128
OUT_FEATURES = 10


def _round_up(x: int, m: int) -> int:
    return ((x + m - 1) // m) * m


def _pick_tiling(requested_tile_b):
    """Generation-aware (tile_b, vmem_limit_bytes)."""
    if requested_tile_b is not None:
        return requested_tile_b, 48 << 20
    try:
        kind = jax.devices()[0].device_kind.lower()
    except Exception:  # pragma: no cover - defensive
        kind = ""
    if ("v5" in kind) or ("v6" in kind):
        # 128 MiB physical VMEM: big tiles amortize the ~0.35us/step overhead.
        # f32 x tile: 8192 x 784 x 4B x 2buf ~= 51 MiB  -> needs a raised limit.
        return 8192, 96 << 20
    # v7x (64 MiB physical VMEM) and unknown chips: stay conservative.
    # f32 x tile: 4096 x 784 x 4B x 2buf ~= 26 MiB, well under a 48 MiB cap.
    return 4096, 48 << 20


def _mlp_kernel(x_ref, w1_ref, b1_ref, w2_ref, b2_ref, o_ref):
    # x_ref : (TILE_B, 784)  f32   (streamed; cast to bf16 post-DMA)
    # w1_ref: (784, 128)     bf16  (resident, (K, N) layout)
    # b1_ref: (1, 128)       f32   (resident)
    # w2_ref: (128, 10)      bf16  (resident, (K, N) layout)
    # b2_ref: (1, 10)        f32   (resident)
    # o_ref : (TILE_B, 10)   f32
    x = x_ref[...].astype(jnp.bfloat16)
    h = jnp.dot(x, w1_ref[...], preferred_element_type=jnp.float32)
    h = jnp.maximum(h + b1_ref[...], 0.0)            # bias + ReLU in f32
    out = jnp.dot(h.astype(jnp.bfloat16), w2_ref[...],
                  preferred_element_type=jnp.float32)
    o_ref[...] = out + b2_ref[...]


def simple_ann_forward(x_nchw, w1, b1, w2, b2, *, tile_b: int | None = None):
    """Forward pass matching the PyTorch SimpleANN module.

    x_nchw: (B, 1, 28, 28) float32
    w1: (128, 784), b1: (128,)   -- PyTorch nn.Linear (out, in) convention
    w2: (10, 128),  b2: (10,)
    returns: (B, 10) float32 logits
    """
    B = x_nchw.shape[0]
    x = x_nchw.reshape(B, -1)                         # nn.Flatten(): (B, 784) f32

    tile_b, vmem_limit = _pick_tiling(tile_b)
    # Clamp the tile for small batches; keep it a multiple of 8 (f32 sublanes).
    tile_b = max(8, min(_round_up(tile_b, 8), _round_up(B, 8)))
    grid = (pl.cdiv(B, tile_b),)                      # ragged last block is OK

    # One-time weight prep (tiny: <0.5 MB): (K, N) layout, bf16 for the MXU.
    w1_kn = w1.T.astype(jnp.bfloat16)                 # (784, 128)
    w2_kn = w2.T.astype(jnp.bfloat16)                 # (128, 10)
    b1_r = b1.reshape(1, HIDDEN).astype(jnp.float32)
    b2_r = b2.reshape(1, OUT_FEATURES).astype(jnp.float32)

    cost = pl.CostEstimate(
        flops=2 * B * (IN_FEATURES * HIDDEN + HIDDEN * OUT_FEATURES),
        transcendentals=0,
        bytes_accessed=(B * IN_FEATURES * 4            # x (f32, streamed once)
                        + IN_FEATURES * HIDDEN * 2     # w1 (bf16)
                        + HIDDEN * OUT_FEATURES * 2    # w2 (bf16)
                        + (HIDDEN + OUT_FEATURES) * 4  # biases (f32)
                        + B * OUT_FEATURES * 4),       # output (f32)
    )

    out = pl.pallas_call(
        _mlp_kernel,
        out_shape=jax.ShapeDtypeStruct((B, OUT_FEATURES), jnp.float32),
        grid_spec=pltpu.PrefetchScalarGridSpec(
            num_scalar_prefetch=0,
            grid=grid,
            in_specs=[
                pl.BlockSpec((tile_b, IN_FEATURES), lambda i: (i, 0)),      # x tile
                pl.BlockSpec((IN_FEATURES, HIDDEN), lambda i: (0, 0)),      # w1 resident
                pl.BlockSpec((1, HIDDEN), lambda i: (0, 0)),                # b1 resident
                pl.BlockSpec((HIDDEN, OUT_FEATURES), lambda i: (0, 0)),     # w2 resident
                pl.BlockSpec((1, OUT_FEATURES), lambda i: (0, 0)),          # b2 resident
            ],
            out_specs=pl.BlockSpec((tile_b, OUT_FEATURES), lambda i: (i, 0)),
        ),
        compiler_params=pltpu.CompilerParams(
            dimension_semantics=("parallel",),
            vmem_limit_bytes=vmem_limit,
        ),
        cost_estimate=cost,
    )(x, w1_kn, b1_r, w2_kn, b2_r)

    return out


def _init_params(key):
    # Deterministic init mimicking PyTorch nn.Linear default:
    # U(-1/sqrt(fan_in), 1/sqrt(fan_in)) for both weight and bias.
    k1, k2, k3, k4 = jax.random.split(key, 4)
    bound1 = 1.0 / jnp.sqrt(float(IN_FEATURES))
    bound2 = 1.0 / jnp.sqrt(float(HIDDEN))
    w1 = jax.random.uniform(k1, (HIDDEN, IN_FEATURES), jnp.float32, -bound1, bound1)
    b1 = jax.random.uniform(k2, (HIDDEN,), jnp.float32, -bound1, bound1)
    w2 = jax.random.uniform(k3, (OUT_FEATURES, HIDDEN), jnp.float32, -bound2, bound2)
    b2 = jax.random.uniform(k4, (OUT_FEATURES,), jnp.float32, -bound2, bound2)
    return w1, b1, w2, b2


if __name__ == "__main__":
    key = jax.random.PRNGKey(0)
    k_x, k_p = jax.random.split(key)

    B = 8
    x = jax.random.normal(k_x, (B, 1, 28, 28), jnp.float32)   # NCHW like PyTorch
    w1, b1, w2, b2 = _init_params(k_p)

    forward = jax.jit(functools.partial(simple_ann_forward))
    out = forward(x, w1, b1, w2, b2)
    out = jax.block_until_ready(out)

    # Reference check in plain JAX (same math as the PyTorch forward, f32).
    ref = jnp.maximum(x.reshape(B, -1) @ w1.T + b1, 0.0) @ w2.T + b2
    assert out.shape == (B, OUT_FEATURES)
    # bf16 weights / bf16 hidden activations -> relaxed tolerance (f32 accum).
    assert jnp.allclose(out, ref, atol=5e-2, rtol=5e-2), (
        f"max abs err {jnp.max(jnp.abs(out - ref))}")

    print("KERNEL_OK")
</pallas_src>

<mosaic_0001>
module attributes {stable_mosaic.version = 11 : i64} {
  func.func @_mlp_kernel(%arg0: i32, %arg1: memref<8x784xf32, #tpu.memory_space<vmem>>, %arg2: memref<784x128xbf16, #tpu.memory_space<vmem>>, %arg3: memref<1x128xf32, #tpu.memory_space<vmem>>, %arg4: memref<128x10xbf16, #tpu.memory_space<vmem>>, %arg5: memref<1x10xf32, #tpu.memory_space<vmem>>, %arg6: memref<8x10xf32, #tpu.memory_space<vmem>>) attributes {dimension_semantics = [#tpu.dimension_semantics<parallel>], iteration_bounds = array<i64: 1>, scalar_prefetch = 0 : i64, scratch_operands = 0 : i64, tpu.core_type = #tpu.core_type<tc>, window_params = [{transform_indices = @transform_0, window_bounds = array<i64: 8, 784>}, {pipeline_mode = #tpu.pipeline_mode<synchronous>, transform_indices = @transform_1, window_bounds = array<i64: 784, 128>}, {pipeline_mode = #tpu.pipeline_mode<synchronous>, transform_indices = @transform_2, window_bounds = array<i64: 1, 128>}, {pipeline_mode = #tpu.pipeline_mode<synchronous>, transform_indices = @transform_3, window_bounds = array<i64: 128, 10>}, {pipeline_mode = #tpu.pipeline_mode<synchronous>, transform_indices = @transform_4, window_bounds = array<i64: 1, 10>}, {transform_indices = @transform_5, window_bounds = array<i64: 8, 10>}]} {
    %c0 = arith.constant 0 : index
    %c0_0 = arith.constant 0 : index
    %0 = vector.load %arg1[%c0, %c0_0] : memref<8x784xf32, #tpu.memory_space<vmem>>, vector<8x784xf32>
    %1 = arith.truncf %0 : vector<8x784xf32> to vector<8x784xbf16>
    %c0_1 = arith.constant 0 : index
    %c0_2 = arith.constant 0 : index
    %2 = vector.load %arg2[%c0_1, %c0_2] : memref<784x128xbf16, #tpu.memory_space<vmem>>, vector<784x128xbf16>
    %cst = arith.constant dense<0.000000e+00> : vector<8x128xf32>
    %3 = tpu.matmul %1, %2, %cst {dimension_numbers = #tpu.dot_dimension_numbers<[1], [0], [0], [1], [0, 0, 1, 1], [], []>} : vector<8x784xbf16>, vector<784x128xbf16>, vector<8x128xf32> -> vector<8x128xf32>
    %c0_3 = arith.constant 0 : index
    %c0_4 = arith.constant 0 : index
    %4 = vector.load %arg3[%c0_3, %c0_4] : memref<1x128xf32, #tpu.memory_space<vmem>>, vector<1x128xf32>
    %5 = vector.broadcast %4 : vector<1x128xf32> to vector<8x128xf32>
    %6 = arith.addf %3, %5 : vector<8x128xf32>
    %cst_5 = arith.constant 0.000000e+00 : f32
    %7 = vector.broadcast %cst_5 : f32 to vector<8x128xf32>
    %8 = arith.maximumf %6, %7 : vector<8x128xf32>
    %9 = arith.truncf %8 : vector<8x128xf32> to vector<8x128xbf16>
    %c0_6 = arith.constant 0 : index
    %c0_7 = arith.constant 0 : index
    %10 = vector.load %arg4[%c0_6, %c0_7] : memref<128x10xbf16, #tpu.memory_space<vmem>>, vector<128x10xbf16>
    %cst_8 = arith.constant dense<0.000000e+00> : vector<8x10xf32>
    %11 = tpu.matmul %9, %10, %cst_8 {dimension_numbers = #tpu.dot_dimension_numbers<[1], [0], [0], [1], [0, 0, 1, 1], [], []>} : vector<8x128xbf16>, vector<128x10xbf16>, vector<8x10xf32> -> vector<8x10xf32>
    %c0_9 = arith.constant 0 : index
    %c0_10 = arith.constant 0 : index
    %12 = vector.load %arg5[%c0_9, %c0_10] : memref<1x10xf32, #tpu.memory_space<vmem>>, vector<1x10xf32>
    %13 = vector.broadcast %12 : vector<1x10xf32> to vector<8x10xf32>
    %14 = arith.addf %11, %13 : vector<8x10xf32>
    %c0_11 = arith.constant 0 : index
    %c0_12 = arith.constant 0 : index
    %15 = vector.load %arg6[%c0_11, %c0_12] : memref<8x10xf32, #tpu.memory_space<vmem>>, vector<8x10xf32>
    tpu.vector_store %arg6[%c0_11, %c0_12], %14 {strides = array<i32>} : memref<8x10xf32, #tpu.memory_space<vmem>>, vector<8x10xf32>,
    return
  }
  func.func @transform_0(%arg0: i32) -> (i32, i32) {
    %c0_i32 = arith.constant 0 : i32
    %c0_i32_0 = arith.constant 0 : i32
    return %arg0, %c0_i32 : i32, i32
  }
  func.func @transform_1(%arg0: i32) -> (i32, i32) {
    %c0_i32 = arith.constant 0 : i32
    %c0_i32_0 = arith.constant 0 : i32
    %c0_i32_1 = arith.constant 0 : i32
    return %c0_i32, %c0_i32_0 : i32, i32
  }
  func.func @transform_2(%arg0: i32) -> (i32, i32) {
    %c0_i32 = arith.constant 0 : i32
    %c0_i32_0 = arith.constant 0 : i32
    %c0_i32_1 = arith.constant 0 : i32
    return %c0_i32, %c0_i32_0 : i32, i32
  }
  func.func @transform_3(%arg0: i32) -> (i32, i32) {
    %c0_i32 = arith.constant 0 : i32
    %c0_i32_0 = arith.constant 0 : i32
    %c0_i32_1 = arith.constant 0 : i32
    return %c0_i32, %c0_i32_0 : i32, i32
  }
  func.func @transform_4(%arg0: i32) -> (i32, i32) {
    %c0_i32 = arith.constant 0 : i32
    %c0_i32_0 = arith.constant 0 : i32
    %c0_i32_1 = arith.constant 0 : i32
    return %c0_i32, %c0_i32_0 : i32, i32
  }
  func.func @transform_5(%arg0: i32) -> (i32, i32) {
    %c0_i32 = arith.constant 0 : i32
    %c0_i32_0 = arith.constant 0 : i32
    return %arg0, %c0_i32 : i32, i32
  }
}

</mosaic_0001>

<llo_original>
// kernel: simple_ann_forward.1
$region0: #{simple_ann_forward.1}
  #allocation0 [shape = 'u32[]', space=smem, size = 0x4, offset = 0x4, fixed_abs, tag = 'smem constant byte address 0x4 - core index']
  #allocation1 [shape = 'u32[72,128]{1,0:T(1,128)}', space=vmem, size = 0x9000, scoped, tag = 'internal scratch']
  %s0 = inlined_call_operand.vmem [shape: f32[8,784], index: 0, kind: input, shape index: {}]
  %s1 = inlined_call_operand.vmem [shape: bf16[784,128], index: 1, kind: input, shape index: {}]
  %s2 = inlined_call_operand.vmem [shape: f32[1,128], index: 2, kind: input, shape index: {}]
  %s3 = inlined_call_operand.vmem [shape: bf16[128,10], index: 3, kind: input, shape index: {}]
  %s4 = inlined_call_operand.vmem [shape: f32[1,10], index: 4, kind: input, shape index: {}]
  %s5 = inlined_call_operand.hbm [shape: f32[8,10], index: 5, kind: output, shape index: {}]
  %s6 = sld [smem:[#allocation0]]
  $region30: #{simple_ann_forward.1} parent=0
    _
  %s8 = ssub.s32 1, %s6
  %s9 = scalar_select 0, %s8, %s6
  $region1: #{simple_ann_forward.1} parent=0
    #allocation2 [shape = 'u8[4096]{0}', space=vmem, size = 0x1000, scoped, tag = 'output window, operand 0, single buffered']
    #allocation3 [shape = 's32[1]{0}', space=sflag, size = 0x4, scoped, tag = 'scoped memory for simple_ann_forward.1']
    %10 = vsyncpa [#allocation3], 0
    // Predicated region
    $region2: #{simple_ann_forward.1} parent=1 // pred_check
      _
    $region3: #{simple_ann_forward.1} parent=1 // pred_check_branch
      %12 = sbr.rel (0) target = $region5
    $region4: #{simple_ann_forward.1} parent=1 // pred_region
      _
    $region5: #{simple_ann_forward.1} parent=1 // pred_fallthru
      _
    // Predicated region
    $region6: #{simple_ann_forward.1} parent=1 // pred_check
      _
    $region7: #{simple_ann_forward.1} parent=1 // pred_check_branch
      %14 = sbr.rel (0) target = $region9
    $region8: #{simple_ann_forward.1} parent=1 // pred_region
      _
    $region9: #{simple_ann_forward.1} parent=1 // pred_fallthru
      _
    // Predicated region
    $region10: #{simple_ann_forward.1} parent=1 // pred_check
      _
    $region11: #{simple_ann_forward.1} parent=1 // pred_check_branch
      %16 = sbr.rel (0) target = $region13
    $region12: #{simple_ann_forward.1} parent=1 // pred_region
      _
    $region13: #{simple_ann_forward.1} parent=1 // pred_fallthru
      _
    // Predicated region
    $region14: #{simple_ann_forward.1} parent=1 // pred_check
      _
    $region15: #{simple_ann_forward.1} parent=1 // pred_check_branch
      %18 = sbr.rel (0) target = $region17
    $region16: #{simple_ann_forward.1} parent=1 // pred_region
      _
    $region17: #{simple_ann_forward.1} parent=1 // pred_fallthru
      _
    // Predicated region
    $region18: #{simple_ann_forward.1} parent=1 // pred_check
      _
    $region19: #{simple_ann_forward.1} parent=1 // pred_check_branch
      %20 = sbr.rel (0) target = $region21
    $region20: #{simple_ann_forward.1} parent=1 // pred_region
      _
    $region21: #{simple_ann_forward.1} parent=1 // pred_fallthru
      _
    %v22 = vld [vmem:[%s0] sm:$0xff]
    %v23 = vld [vmem:[%s0 + $0x8] sm:$0xff]
    %v24 = vld [vmem:[%s0 + $0x10] sm:$0xff]
    %v25 = vld [vmem:[%s0 + $0x18] sm:$0xff]
    %v26 = vld [vmem:[%s0 + $0x20] sm:$0xff]
    %v27 = vld [vmem:[%s0 + $0x28] sm:$0xff]
    %v28 = vld [vmem:[%s0 + $0x30] sm:$0xff]
    %v29 = vpack.c.bf16 %v22, %v22
    %v30 = vpack.c.bf16 %v23, %v23
    %v31 = vpack.c.bf16 %v24, %v24
    %v32 = vpack.c.bf16 %v25, %v25
    %v33 = vpack.c.bf16 %v26, %v26
    %v34 = vpack.c.bf16 %v27, %v27
    %v35 = vpack.c.bf16 %v28, %v28
    %v36 = vld [vmem:[%s1] sm:$0xf]
    %v37 = vld [vmem:[%s1 + $0x4] sm:$0xf]
    %v38 = vld [vmem:[%s1 + $0x8] sm:$0xf]
    %v39 = vld [vmem:[%s1 + $0xc] sm:$0xf]
    %v40 = vld [vmem:[%s1 + $0x10] sm:$0xf]
    %v41 = vld [vmem:[%s1 + $0x14] sm:$0xf]
    %v42 = vld [vmem:[%s1 + $0x18] sm:$0xf]
    %v43 = vld [vmem:[%s1 + $0x1c] sm:$0xf]
    %v44 = vld [vmem:[%s1 + $0x20] sm:$0xf]
    %v45 = vld [vmem:[%s1 + $0x24] sm:$0xf]
    %v46 = vld [vmem:[%s1 + $0x28] sm:$0xf]
    %v47 = vld [vmem:[%s1 + $0x2c] sm:$0xf]
    %v48 = vld [vmem:[%s1 + $0x30] sm:$0xf]
    %v49 = vld [vmem:[%s1 + $0x34] sm:$0xf]
    %v50 = vld [vmem:[%s1 + $0x38] sm:$0xf]
    %v51 = vld [vmem:[%s1 + $0x3c] sm:$0xf]
    %v52 = vld [vmem:[%s1 + $0x40] sm:$0xf]
    %v53 = vld [vmem:[%s1 + $0x44] sm:$0xf]
    %v54 = vld [vmem:[%s1 + $0x48] sm:$0xf]
    %v55 = vld [vmem:[%s1 + $0x4c] sm:$0xf]
    %v56 = vld [vmem:[%s1 + $0x50] sm:$0xf]
    %v57 = vld [vmem:[%s1 + $0x54] sm:$0xf]
    %v58 = vld [vmem:[%s1 + $0x58] sm:$0xf]
    %v59 = vld [vmem:[%s1 + $0x5c] sm:$0xf]
    %v60 = vld [vmem:[%s1 + $0x60] sm:$0xf]
    %v61 = vld [vmem:[%s1 + $0x64] sm:$0xf]
    %v62 = vld [vmem:[%s1 + $0x68] sm:$0xf]
    %v63 = vld [vmem:[%s1 + $0x6c] sm:$0xf]
    %v64 = vld [vmem:[%s1 + $0x70] sm:$0xf]
    %v65 = vld [vmem:[%s1 + $0x74] sm:$0xf]
    %v66 = vld [vmem:[%s1 + $0x78] sm:$0xf]
    %v67 = vld [vmem:[%s1 + $0x7c] sm:$0xf]
    %v68 = vld [vmem:[%s1 + $0x80] sm:$0xf]
    %v69 = vld [vmem:[%s1 + $0x84] sm:$0xf]
    %v70 = vld [vmem:[%s1 + $0x88] sm:$0xf]
    %v71 = vld [vmem:[%s1 + $0x8c] sm:$0xf]
    %v72 = vld [vmem:[%s1 + $0x90] sm:$0xf]
    %v73 = vld [vmem:[%s1 + $0x94] sm:$0xf]
    %v74 = vld [vmem:[%s1 + $0x98] sm:$0xf]
    %v75 = vld [vmem:[%s1 + $0x9c] sm:$0xf]
    %v76 = vld [vmem:[%s1 + $0xa0] sm:$0xf]
    %v77 = vld [vmem:[%s1 + $0xa4] sm:$0xf]
    %v78 = vld [vmem:[%s1 + $0xa8] sm:$0xf]
    %v79 = vld [vmem:[%s1 + $0xac] sm:$0xf]
    %v80 = vld [vmem:[%s1 + $0xb0] sm:$0xf]
    %v81 = vld [vmem:[%s1 + $0xb4] sm:$0xf]
    %v82 = vld [vmem:[%s1 + $0xb8] sm:$0xf]
    %v83 = vld [vmem:[%s1 + $0xbc] sm:$0xf]
    %v84 = vld [vmem:[%s1 + $0xc0] sm:$0xf]
    %v85 = vld [vmem:[%s1 + $0xc4] sm:$0xf]
    %v86 = vld [vmem:[%s1 + $0xc8] sm:$0xf]
    %v87 = vld [vmem:[%s1 + $0xcc] sm:$0xf]
    %v88 = vld [vmem:[%s1 + $0xd0] sm:$0xf]
    %v89 = vld [vmem:[%s1 + $0xd4] sm:$0xf]
    %v90 = vld [vmem:[%s1 + $0xd8] sm:$0xf]
    %v91 = vld [vmem:[%s1 + $0xdc] sm:$0xf]
    %v92 = vld [vmem:[%s1 + $0xe0] sm:$0xf]
    %v93 = vld [vmem:[%s1 + $0xe4] sm:$0xf]
    %v94 = vld [vmem:[%s1 + $0xe8] sm:$0xf]
    %v95 = vld [vmem:[%s1 + $0xec] sm:$0xf]
    %v96 = vld [vmem:[%s1 + $0xf0] sm:$0xf]
    %v97 = vld [vmem:[%s1 + $0xf4] sm:$0xf]
    %v98 = vld [vmem:[%s1 + $0xf8] sm:$0xf]
    %v99 = vld [vmem:[%s1 + $0xfc] sm:$0xf]
    %v100 = vld [vmem:[%s1 + $0x100] sm:$0xf]
    %v101 = vld [vmem:[%s1 + $0x104] sm:$0xf]
    %v102 = vld [vmem:[%s1 + $0x108] sm:$0xf]
    %v103 = vld [vmem:[%s1 + $0x10c] sm:$0xf]
    %v104 = vld [vmem:[%s1 + $0x110] sm:$0xf]
    %v105 = vld [vmem:[%s1 + $0x114] sm:$0xf]
    %v106 = vld [vmem:[%s1 + $0x118] sm:$0xf]
    %v107 = vld [vmem:[%s1 + $0x11c] sm:$0xf]
    %v108 = vld [vmem:[%s1 + $0x120] sm:$0xf]
    %v109 = vld [vmem:[%s1 + $0x124] sm:$0xf]
    %v110 = vld [vmem:[%s1 + $0x128] sm:$0xf]
    %v111 = vld [vmem:[%s1 + $0x12c] sm:$0xf]
    %v112 = vld [vmem:[%s1 + $0x130] sm:$0xf]
    %v113 = vld [vmem:[%s1 + $0x134] sm:$0xf]
    %v114 = vld [vmem:[%s1 + $0x138] sm:$0xf]
    %v115 = vld [vmem:[%s1 + $0x13c] sm:$0xf]
    %v116 = vld [vmem:[%s1 + $0x140] sm:$0xf]
    %v117 = vld [vmem:[%s1 + $0x144] sm:$0xf]
    %v118 = vld [vmem:[%s1 + $0x148] sm:$0xf]
    %v119 = vld [vmem:[%s1 + $0x14c] sm:$0xf]
    %v120 = vld [vmem:[%s1 + $0x150] sm:$0xf]
    %v121 = vld [vmem:[%s1 + $0x154] sm:$0xf]
    %v122 = vld [vmem:[%s1 + $0x158] sm:$0xf]
    %v123 = vld [vmem:[%s1 + $0x15c] sm:$0xf]
    %v124 = vld [vmem:[%s1 + $0x160] sm:$0xf]
    %v125 = vld [vmem:[%s1 + $0x164] sm:$0xf]
    %v126 = vld [vmem:[%s1 + $0x168] sm:$0xf]
    %v127 = vld [vmem:[%s1 + $0x16c] sm:$0xf]
    %v128 = vld [vmem:[%s1 + $0x170] sm:$0xf]
    %v129 = vld [vmem:[%s1 + $0x174] sm:$0xf]
    %v130 = vld [vmem:[%s1 + $0x178] sm:$0xf]
    %v131 = vld [vmem:[%s1 + $0x17c] sm:$0xf]
    %v132 = vld [vmem:[%s1 + $0x180] sm:$0xf]
    %v133 = vld [vmem:[%s1 + $0x184] sm:$0xf]
    %v134 = vld [vmem:[%s2] sm:$0x1]
    %v136 = vperm.slane %v134, 0
    %v236 = vunpack.c.l.b16 %v36
    %v237 = vunpack.c.l.b16 %v37
    %v238 = vunpack.c.l.b16 %v38
    %v239 = vunpack.c.l.b16 %v39
    %v240 = vunpack.c.l.b16 %v40
    %v241 = vunpack.c.l.b16 %v41
    %v242 = vunpack.c.l.b16 %v42
    %v243 = vunpack.c.l.b16 %v43
    %v244 = vunpack.c.l.b16 %v44
    %v245 = vunpack.c.l.b16 %v45
    %v246 = vunpack.c.l.b16 %v46
    %v247 = vunpack.c.l.b16 %v47
    %v248 = vunpack.c.l.b16 %v48
    %v249 = vunpack.c.l.b16 %v49
    %v250 = vunpack.c.l.b16 %v50
    %v251 = vunpack.c.l.b16 %v51
    %v252 = vunpack.c.l.b16 %v52
    %v253 = vunpack.c.l.b16 %v53
    %v254 = vunpack.c.l.b16 %v54
    %v255 = vunpack.c.l.b16 %v55
    %v256 = vunpack.c.l.b16 %v56
    %v257 = vunpack.c.l.b16 %v57
    %v258 = vunpack.c.l.b16 %v58
    %v259 = vunpack.c.l.b16 %v59
    %v260 = vunpack.c.l.b16 %v60
    %v261 = vunpack.c.l.b16 %v61
    %v262 = vunpack.c.l.b16 %v62
    %v263 = vunpack.c.l.b16 %v63
    %v264 = vunpack.c.l.b16 %v64
    %v265 = vunpack.c.l.b16 %v65
    %v266 = vunpack.c.l.b16 %v66
    %v267 = vunpack.c.l.b16 %v67
    %v268 = vunpack.c.l.b16 %v68
    %v269 = vunpack.c.l.b16 %v69
    %v270 = vunpack.c.l.b16 %v70
    %v271 = vunpack.c.l.b16 %v71
    %v272 = vunpack.c.l.b16 %v72
    %v273 = vunpack.c.l.b16 %v73
    %v274 = vunpack.c.l.b16 %v74
    %v275 = vunpack.c.l.b16 %v75
    %v276 = vunpack.c.l.b16 %v76
    %v277 = vunpack.c.l.b16 %v77
    %v278 = vunpack.c.l.b16 %v78
    %v279 = vunpack.c.l.b16 %v79
    %v280 = vunpack.c.l.b16 %v80
    %v281 = vunpack.c.l.b16 %v81
    %v282 = vunpack.c.l.b16 %v82
    %v283 = vunpack.c.l.b16 %v83
    %v284 = vunpack.c.l.b16 %v84
    %v285 = vunpack.c.l.b16 %v85
    %v286 = vunpack.c.l.b16 %v86
    %v287 = vunpack.c.l.b16 %v87
    %v288 = vunpack.c.l.b16 %v88
    %v289 = vunpack.c.l.b16 %v89
    %v290 = vunpack.c.l.b16 %v90
    %v291 = vunpack.c.l.b16 %v91
    %v292 = vunpack.c.l.b16 %v92
    %v293 = vunpack.c.l.b16 %v93
    %v294 = vunpack.c.l.b16 %v94
    %v295 = vunpack.c.l.b16 %v95
    %v296 = vunpack.c.l.b16 %v96
    %v297 = vunpack.c.l.b16 %v97
    %v298 = vunpack.c.l.b16 %v98
    %v299 = vunpack.c.l.b16 %v99
    %v300 = vunpack.c.l.b16 %v100
    %v301 = vunpack.c.l.b16 %v101
    %v302 = vunpack.c.l.b16 %v102
    %v303 = vunpack.c.l.b16 %v103
    %v304 = vunpack.c.l.b16 %v104
    %v305 = vunpack.c.l.b16 %v105
    %v306 = vunpack.c.l.b16 %v106
    %v307 = vunpack.c.l.b16 %v107
    %v308 = vunpack.c.l.b16 %v108
    %v309 = vunpack.c.l.b16 %v109
    %v310 = vunpack.c.l.b16 %v110
    %v311 = vunpack.c.l.b16 %v111
    %v312 = vunpack.c.l.b16 %v112
    %v313 = vunpack.c.l.b16 %v113
    %v314 = vunpack.c.l.b16 %v114
    %v315 = vunpack.c.l.b16 %v115
    %v316 = vunpack.c.l.b16 %v116
    %v317 = vunpack.c.l.b16 %v117
    %v318 = vunpack.c.l.b16 %v118
    %v319 = vunpack.c.l.b16 %v119
    %v320 = vunpack.c.l.b16 %v120
    %v321 = vunpack.c.l.b16 %v121
    %v322 = vunpack.c.l.b16 %v122
    %v323 = vunpack.c.l.b16 %v123
    %v324 = vunpack.c.l.b16 %v124
    %v325 = vunpack.c.l.b16 %v125
    %v326 = vunpack.c.l.b16 %v126
    %v327 = vunpack.c.l.b16 %v127
    %v328 = vunpack.c.l.b16 %v128
    %v329 = vunpack.c.l.b16 %v129
    %v330 = vunpack.c.l.b16 %v130
    %v331 = vunpack.c.l.b16 %v131
    %v332 = vunpack.c.l.b16 %v132
    %v333 = vunpack.c.l.b16 %v133
    %v334 = vpack.c.b16 %v237, %v236
    %v335 = vpack.c.b16 %v239, %v238
    %v336 = vpack.c.b16 %v241, %v240
    %v337 = vpack.c.b16 %v243, %v242
    %v338 = vpack.c.b16 %v245, %v244
    %v339 = vpack.c.b16 %v247, %v246
    %v340 = vpack.c.b16 %v249, %v248
    %v341 = vpack.c.b16 %v251, %v250
    %v342 = vpack.c.b16 %v253, %v252
    %v343 = vpack.c.b16 %v255, %v254
    %v344 = vpack.c.b16 %v257, %v256
    %v345 = vpack.c.b16 %v259, %v258
    %v346 = vpack.c.b16 %v261, %v260
    %v347 = vpack.c.b16 %v263, %v262
    %v348 = vpack.c.b16 %v265, %v264
    %v349 = vpack.c.b16 %v267, %v266
    %v350 = vpack.c.b16 %v269, %v268
    %v351 = vpack.c.b16 %v271, %v270
    %v352 = vpack.c.b16 %v273, %v272
    %v353 = vpack.c.b16 %v275, %v274
    %v354 = vpack.c.b16 %v277, %v276
    %v355 = vpack.c.b16 %v279, %v278
    %v356 = vpack.c.b16 %v281, %v280
    %v357 = vpack.c.b16 %v283, %v282
    %v358 = vpack.c.b16 %v285, %v284
    %v359 = vpack.c.b16 %v287, %v286
    %v360 = vpack.c.b16 %v289, %v288
    %v361 = vpack.c.b16 %v291, %v290
    %v362 = vpack.c.b16 %v293, %v292
    %v363 = vpack.c.b16 %v295, %v294
    %v364 = vpack.c.b16 %v297, %v296
    %v365 = vpack.c.b16 %v299, %v298
    %v366 = vpack.c.b16 %v301, %v300
    %v367 = vpack.c.b16 %v303, %v302
    %v368 = vpack.c.b16 %v305, %v304
    %v369 = vpack.c.b16 %v307, %v306
    %v370 = vpack.c.b16 %v309, %v308
    %v371 = vpack.c.b16 %v311, %v310
    %v372 = vpack.c.b16 %v313, %v312
    %v373 = vpack.c.b16 %v315, %v314
    %v374 = vpack.c.b16 %v317, %v316
    %v375 = vpack.c.b16 %v319, %v318
    %v376 = vpack.c.b16 %v321, %v320
    %v377 = vpack.c.b16 %v323, %v322
    %v378 = vpack.c.b16 %v325, %v324
    %v379 = vpack.c.b16 %v327, %v326
    %v380 = vpack.c.b16 %v329, %v328
    %v381 = vpack.c.b16 %v331, %v330
    %v382 = vpack.c.b16 %v333, %v332
    %vm432 = vcmask 130048
    %v434 = vsel %vm432, %v35, 0
    %436 = vmatpush.bf16.msra.mxu0 %v341
    %437 = vmatpush.bf16.msra.mxu0 %v340
    %438 = vmatpush.bf16.msra.mxu0 %v339
    %439 = vmatpush.bf16.msra.mxu0 %v338
    %440 = vmatpush.bf16.msra.mxu0 %v337
    %441 = vmatpush.bf16.msra.mxu0 %v336
    %442 = vmatpush.bf16.msra.mxu0 %v335
    %443 = vmatpush.bf16.msra.mxu0 %v334
    %444 = vmatmul.bf16.gmra.mxu0 %v29
    %v445 = vpop.f32.mrf.mxu0
    %v446 = vadd.f32 %v136, %v445
    %v447 = vpop.f32.mrf.mxu0
    %448 = vdwg.mxu0
    %449 = vmatpush.bf16.msra.mxu0 %v349
    %450 = vmatpush.bf16.msra.mxu0 %v348
    %451 = vmatpush.bf16.msra.mxu0 %v347
    %452 = vmatpush.bf16.msra.mxu0 %v346
    %453 = vmatpush.bf16.msra.mxu0 %v345
    %454 = vmatpush.bf16.msra.mxu0 %v344
    %455 = vmatpush.bf16.msra.mxu0 %v343
    %456 = vmatpush.bf16.msra.mxu0 %v342
    %457 = vmatmul.bf16.gmra.mxu0 %v30
    %v458 = vpop.f32.mrf.mxu0
    %v459 = vadd.f32 %v446, %v458
    %v460 = vpop.f32.mrf.mxu0
    %461 = vdwg.mxu0
    %462 = vmatpush.bf16.msra.mxu0 %v357
    %463 = vmatpush.bf16.msra.mxu0 %v356
    %464 = vmatpush.bf16.msra.mxu0 %v355
    %465 = vmatpush.bf16.msra.mxu0 %v354
    %466 = vmatpush.bf16.msra.mxu0 %v353
    %467 = vmatpush.bf16.msra.mxu0 %v352
    %468 = vmatpush.bf16.msra.mxu0 %v351
    %469 = vmatpush.bf16.msra.mxu0 %v350
    %470 = vmatmul.bf16.gmra.mxu0 %v31
    %v471 = vpop.f32.mrf.mxu0
    %v472 = vadd.f32 %v459, %v471
    %v473 = vpop.f32.mrf.mxu0
    %474 = vdwg.mxu0
    %475 = vmatpush.bf16.msra.mxu0 %v365
    %476 = vmatpush.bf16.msra.mxu0 %v364
    %477 = vmatpush.bf16.msra.mxu0 %v363
    %478 = vmatpush.bf16.msra.mxu0 %v362
    %479 = vmatpush.bf16.msra.mxu0 %v361
    %480 = vmatpush.bf16.msra.mxu0 %v360
    %481 = vmatpush.bf16.msra.mxu0 %v359
    %482 = vmatpush.bf16.msra.mxu0 %v358
    %483 = vmatmul.bf16.gmra.mxu0 %v32
    %v484 = vpop.f32.mrf.mxu0
    %v485 = vadd.f32 %v472, %v484
    %v486 = vpop.f32.mrf.mxu0
    %487 = vdwg.mxu0
    %488 = vmatpush.bf16.msra.mxu0 %v373
    %489 = vmatpush.bf16.msra.mxu0 %v372
    %490 = vmatpush.bf16.msra.mxu0 %v371
    %491 = vmatpush.bf16.msra.mxu0 %v370
    %492 = vmatpush.bf16.msra.mxu0 %v369
    %493 = vmatpush.bf16.msra.mxu0 %v368
    %494 = vmatpush.bf16.msra.mxu0 %v367
    %495 = vmatpush.bf16.msra.mxu0 %v366
    %496 = vmatmul.bf16.gmra.mxu0 %v33
    %v497 = vpop.f32.mrf.mxu0
    %v498 = vadd.f32 %v485, %v497
    %v499 = vpop.f32.mrf.mxu0
    %500 = vdwg.mxu0
    %501 = vmatpush.bf16.msra.mxu0 %v381
    %502 = vmatpush.bf16.msra.mxu0 %v380
    %503 = vmatpush.bf16.msra.mxu0 %v379
    %504 = vmatpush.bf16.msra.mxu0 %v378
    %505 = vmatpush.bf16.msra.mxu0 %v377
    %506 = vmatpush.bf16.msra.mxu0 %v376
    %507 = vmatpush.bf16.msra.mxu0 %v375
    %508 = vmatpush.bf16.msra.mxu0 %v374
    %509 = vmatmul.bf16.gmra.mxu0 %v34
    %v510 = vpop.f32.mrf.mxu0
    %v511 = vadd.f32 %v498, %v510
    %v512 = vpop.f32.mrf.mxu0
    %513 = vdwg.mxu0
    %514 = vmatpush.bf16.msra.mxu0 0
    %515 = vmatpush.bf16.msra.mxu0 0
    %516 = vmatpush.bf16.msra.mxu0 0
    %517 = vmatpush.bf16.msra.mxu0 0
    %518 = vmatpush.bf16.msra.mxu0 0
    %519 = vmatpush.bf16.msra.mxu0 0
    %520 = vmatpush.bf16.msra.mxu0 0
    %521 = vmatpush.bf16.msra.mxu0 %v382
    %522 = vmatmul.bf16.gmra.mxu0 %v434
    %v523 = vpop.f32.mrf.mxu0
    %v524 = vadd.f32 %v511, %v523
    %v525 = vpop.f32.mrf.mxu0
    %526 = vdwg.mxu0
    %v527 = vmax.f32 %v524, 0.0
    %v528 = vpack.c.bf16 %v527, %v527
    %v529 = vld [vmem:[%s3] sm:$0xf]
    %v530 = vld [vmem:[%s3 + $0x4] sm:$0xf]
    %v531 = vld [vmem:[%s3 + $0x8] sm:$0xf]
    %v532 = vld [vmem:[%s3 + $0xc] sm:$0xf]
    %v533 = vld [vmem:[%s3 + $0x10] sm:$0xf]
    %v534 = vld [vmem:[%s3 + $0x14] sm:$0xf]
    %v535 = vld [vmem:[%s3 + $0x18] sm:$0xf]
    %v536 = vld [vmem:[%s3 + $0x1c] sm:$0xf]
    %v537 = vld [vmem:[%s3 + $0x20] sm:$0xf]
    %v538 = vld [vmem:[%s3 + $0x24] sm:$0xf]
    %v539 = vld [vmem:[%s3 + $0x28] sm:$0xf]
    %v540 = vld [vmem:[%s3 + $0x2c] sm:$0xf]
    %v541 = vld [vmem:[%s3 + $0x30] sm:$0xf]
    %v542 = vld [vmem:[%s3 + $0x34] sm:$0xf]
    %v543 = vld [vmem:[%s3 + $0x38] sm:$0xf]
    %v544 = vld [vmem:[%s3 + $0x3c] sm:$0xf]
    %v545 = vld [vmem:[%s4] sm:$0x1]
    %v547 = vperm.slane %v545, 0
    %v565 = vunpack.c.l.b16 %v529
    %v566 = vunpack.c.l.b16 %v530
    %v567 = vunpack.c.l.b16 %v531
    %v568 = vunpack.c.l.b16 %v532
    %v569 = vunpack.c.l.b16 %v533
    %v570 = vunpack.c.l.b16 %v534
    %v571 = vunpack.c.l.b16 %v535
    %v572 = vunpack.c.l.b16 %v536
    %v573 = vunpack.c.l.b16 %v537
    %v574 = vunpack.c.l.b16 %v538
    %v575 = vunpack.c.l.b16 %v539
    %v576 = vunpack.c.l.b16 %v540
    %v577 = vunpack.c.l.b16 %v541
    %v578 = vunpack.c.l.b16 %v542
    %v579 = vunpack.c.l.b16 %v543
    %v580 = vunpack.c.l.b16 %v544
    %v581 = vpack.c.b16 %v566, %v565
    %v582 = vpack.c.b16 %v568, %v567
    %v583 = vpack.c.b16 %v570, %v569
    %v584 = vpack.c.b16 %v572, %v571
    %v585 = vpack.c.b16 %v574, %v573
    %v586 = vpack.c.b16 %v576, %v575
    %v587 = vpack.c.b16 %v578, %v577
    %v588 = vpack.c.b16 %v580, %v579
    %597 = vmatpush.bf16.msra.mxu0 %v588
    %598 = vmatpush.bf16.msra.mxu0 %v587
    %599 = vmatpush.bf16.msra.mxu0 %v586
    %600 = vmatpush.bf16.msra.mxu0 %v585
    %601 = vmatpush.bf16.msra.mxu0 %v584
    %602 = vmatpush.bf16.msra.mxu0 %v583
    %603 = vmatpush.bf16.msra.mxu0 %v582
    %604 = vmatpush.bf16.msra.mxu0 %v581
    %605 = vmatmul.bf16.gmra.mxu0 %v528
    %v606 = vpop.f32.mrf.mxu0
    %v607 = vadd.f32 %v547, %v606
    %v608 = vpop.f32.mrf.mxu0
    %609 = vdwg.mxu0
    %vm610 = vcmask 80896
    %611 = vst.msk [vmem:[#allocation2] sm:$0xff] %vm610, %v607
    // Predicated region
    $region22: #{simple_ann_forward.1} parent=1 // pred_check
      _
    $region23: #{simple_ann_forward.1} parent=1 // pred_check_branch
      %613 = sbr.rel (0) target = $region25
    $region24: #{simple_ann_forward.1} parent=1 // pred_region
      %615 = vsyncadd [#allocation3], 0
      %s617 = sshll.u32 [#allocation2], 4
      %s618 = int_to_ptr.vmem [resolvable:$true] %s617
      %s619 = sshll.u32 %s5, 4
      %s620 = int_to_ptr.hbm [resolvable:$true] %s619
      %622 = dma.vmem_to_hbm [thread:$0]  %s618, 128, %s620, [#allocation3]
    $region25: #{simple_ann_forward.1} parent=1 // pred_fallthru
      _
    // Predicated region
    $region26: #{simple_ann_forward.1} parent=1 // pred_check
      _
    $region27: #{simple_ann_forward.1} parent=1 // pred_check_branch
      %624 = sbr.rel (0) target = $region29
    $region28: #{simple_ann_forward.1} parent=1 // pred_region
      %626 = dma.done [#allocation3], 128
    $region29: #{simple_ann_forward.1} parent=1 // pred_fallthru
      _
    %627 = vsyncpa [#allocation3], 1

</llo_original>
